<compile_context>
chip_gen: v6e
topology: v6e:2x2x1
jax: 0.10.0
libtpu: 0.0.40
codegen_flags: <defaults>
</compile_context>

<pallas_src>
import jax
import jax.numpy as jnp
from jax.experimental import pallas as pl
from jax.experimental.pallas import tpu as pltpu

IN_DIM, HID0, HID1, HID2, OUT_DIM = 5, 30, 64, 16, 1


def _mlp_kernel(xT_ref,
                w0_ref, b0_ref,
                w1_ref, b1_ref,
                w2_ref, b2_ref,
                w3_ref, b3_ref,
                o_ref):
    # Lane-dense layout: batch on the last (128-lane) axis of every tile.
    x = xT_ref[...]                                                    # (5, T)

    # input: Linear(5, 30) + ReLU
    h = jnp.dot(w0_ref[...], x, preferred_element_type=jnp.float32)   # (30, T)
    h = jnp.maximum(h + b0_ref[...], 0.0)

    # fc1: Linear(30, 64) + ReLU
    h = jnp.dot(w1_ref[...], h, preferred_element_type=jnp.float32)   # (64, T)
    h = jnp.maximum(h + b1_ref[...], 0.0)

    # fc2: Linear(64, 16) + ReLU
    h = jnp.dot(w2_ref[...], h, preferred_element_type=jnp.float32)   # (16, T)
    h = jnp.maximum(h + b2_ref[...], 0.0)

    # fc3: Linear(16, 1) + Sigmoid — done on VPU/XLU: an MXU matmul with one
    # live output lane would waste an entire pass + result-FIFO pop.
    logits = jnp.sum(w3_ref[...] * h, axis=0, keepdims=True) + b3_ref[...]  # (1, T)
    o_ref[...] = 1.0 / (1.0 + jnp.exp(-logits))


def _round_up(x, m):
    return ((x + m - 1) // m) * m


def breast_cancer_forward(x, params, *, tile_n=8192):
    """x: (N, 5) float32; params: PyTorch-layout weights (out, in). Returns (N, 1)."""
    n = x.shape[0]
    assert x.shape[1] == IN_DIM
    assert tile_n % 128 == 0

    w0, b0 = params["w0"], params["b0"]   # (30, 5),  (30,)
    w1, b1 = params["w1"], params["b1"]   # (64, 30), (64,)
    w2, b2 = params["w2"], params["b2"]   # (16, 64), (16,)
    w3, b3 = params["w3"], params["b3"]   # (1, 16),  (1,)

    # Biases as (out, 1) columns -> broadcast across the lane (batch) axis.
    b0c = b0.reshape(-1, 1).astype(jnp.float32)
    b1c = b1.reshape(-1, 1).astype(jnp.float32)
    b2c = b2.reshape(-1, 1).astype(jnp.float32)
    b3c = b3.reshape(1, 1).astype(jnp.float32)
    w3c = w3.reshape(-1, 1).astype(jnp.float32)   # (16, 1) for the VPU final layer

    tile = min(tile_n, _round_up(n, 128))
    n_pad = _round_up(n, tile)
    grid = (n_pad // tile,)

    # Lane-dense plumbing: batch on the last axis, padded up to the tile size.
    xT = jnp.transpose(x.astype(jnp.float32))          # (5, N)
    xT = jnp.pad(xT, ((0, 0), (0, n_pad - n)))         # (5, N_pad)

    const = lambda i: (0, 0)

    out = pl.pallas_call(
        _mlp_kernel,
        out_shape=jax.ShapeDtypeStruct((1, n_pad), jnp.float32),
        grid=grid,
        in_specs=[
            pl.BlockSpec((IN_DIM, tile), lambda i: (0, i)),
            pl.BlockSpec(w0.shape, const), pl.BlockSpec(b0c.shape, const),
            pl.BlockSpec(w1.shape, const), pl.BlockSpec(b1c.shape, const),
            pl.BlockSpec(w2.shape, const), pl.BlockSpec(b2c.shape, const),
            pl.BlockSpec(w3c.shape, const), pl.BlockSpec(b3c.shape, const),
        ],
        out_specs=pl.BlockSpec((1, tile), lambda i: (0, i)),
        compiler_params=pltpu.CompilerParams(
            dimension_semantics=("parallel",)),
    )(xT,
      w0.astype(jnp.float32), b0c,
      w1.astype(jnp.float32), b1c,
      w2.astype(jnp.float32), b2c,
      w3c, b3c)

    return out[0, :n].reshape(n, 1)


def init_params(key):
    """PyTorch-layout (out, in) weights with nn.Linear's default uniform init."""
    dims = [(IN_DIM, HID0), (HID0, HID1), (HID1, HID2), (HID2, OUT_DIM)]
    params = {}
    keys = jax.random.split(key, 2 * len(dims))
    for i, (fan_in, fan_out) in enumerate(dims):
        bound = 1.0 / jnp.sqrt(float(fan_in))
        params[f"w{i}"] = jax.random.uniform(
            keys[2 * i], (fan_out, fan_in),
            minval=-bound, maxval=bound, dtype=jnp.float32)
        params[f"b{i}"] = jax.random.uniform(
            keys[2 * i + 1], (fan_out,),
            minval=-bound, maxval=bound, dtype=jnp.float32)
    return params


def _reference_forward(x, params):
    h = jnp.maximum(x @ params["w0"].T + params["b0"], 0.0)
    h = jnp.maximum(h @ params["w1"].T + params["b1"], 0.0)
    h = jnp.maximum(h @ params["w2"].T + params["b2"], 0.0)
    z = h @ params["w3"].T + params["b3"]
    return 1.0 / (1.0 + jnp.exp(-z))


if __name__ == "__main__":
    key = jax.random.PRNGKey(0)
    k_params, k_x = jax.random.split(key)

    params = init_params(k_params)
    batch = 1000                      # not tile-aligned -> exercises padding path
    x = jax.random.normal(k_x, (batch, IN_DIM), dtype=jnp.float32)

    out = breast_cancer_forward(x, params, tile_n=256)   # 4 pipelined grid steps
    out = jax.block_until_ready(out)

    ref = _reference_forward(x, params)
    assert out.shape == (batch, 1)
    assert jnp.allclose(out, ref, atol=1e-5, rtol=1e-5), \
        float(jnp.max(jnp.abs(out - ref)))

    print("KERNEL_OK")
</pallas_src>

<mosaic_0001>
module attributes {stable_mosaic.version = 11 : i64} {
  func.func @_mlp_kernel(%arg0: i32, %arg1: memref<5x256xf32, #tpu.memory_space<vmem>>, %arg2: memref<30x5xf32, #tpu.memory_space<vmem>>, %arg3: memref<30x1xf32, #tpu.memory_space<vmem>>, %arg4: memref<64x30xf32, #tpu.memory_space<vmem>>, %arg5: memref<64x1xf32, #tpu.memory_space<vmem>>, %arg6: memref<16x64xf32, #tpu.memory_space<vmem>>, %arg7: memref<16x1xf32, #tpu.memory_space<vmem>>, %arg8: memref<16x1xf32, #tpu.memory_space<vmem>>, %arg9: memref<1x1xf32, #tpu.memory_space<vmem>>, %arg10: memref<1x256xf32, #tpu.memory_space<vmem>>) attributes {dimension_semantics = [#tpu.dimension_semantics<parallel>], iteration_bounds = array<i64: 4>, scalar_prefetch = 0 : i64, scratch_operands = 0 : i64, tpu.core_type = #tpu.core_type<tc>, window_params = [{transform_indices = @transform_0, window_bounds = array<i64: 5, 256>}, {pipeline_mode = #tpu.pipeline_mode<synchronous>, transform_indices = @transform_1, window_bounds = array<i64: 30, 5>}, {pipeline_mode = #tpu.pipeline_mode<synchronous>, transform_indices = @transform_2, window_bounds = array<i64: 30, 1>}, {pipeline_mode = #tpu.pipeline_mode<synchronous>, transform_indices = @transform_3, window_bounds = array<i64: 64, 30>}, {pipeline_mode = #tpu.pipeline_mode<synchronous>, transform_indices = @transform_4, window_bounds = array<i64: 64, 1>}, {pipeline_mode = #tpu.pipeline_mode<synchronous>, transform_indices = @transform_5, window_bounds = array<i64: 16, 64>}, {pipeline_mode = #tpu.pipeline_mode<synchronous>, transform_indices = @transform_6, window_bounds = array<i64: 16, 1>}, {pipeline_mode = #tpu.pipeline_mode<synchronous>, transform_indices = @transform_7, window_bounds = array<i64: 16, 1>}, {pipeline_mode = #tpu.pipeline_mode<synchronous>, transform_indices = @transform_8, window_bounds = array<i64: 1, 1>}, {transform_indices = @transform_9, window_bounds = array<i64: 1, 256>}]} {
    %c0 = arith.constant 0 : index
    %c0_0 = arith.constant 0 : index
    %0 = vector.load %arg1[%c0, %c0_0] : memref<5x256xf32, #tpu.memory_space<vmem>>, vector<5x256xf32>
    %c0_1 = arith.constant 0 : index
    %c0_2 = arith.constant 0 : index
    %1 = vector.load %arg2[%c0_1, %c0_2] : memref<30x5xf32, #tpu.memory_space<vmem>>, vector<30x5xf32>
    %cst = arith.constant dense<0.000000e+00> : vector<30x256xf32>
    %2 = tpu.matmul %1, %0, %cst {dimension_numbers = #tpu.dot_dimension_numbers<[1], [0], [0], [1], [0, 0, 1, 1], [], []>} : vector<30x5xf32>, vector<5x256xf32>, vector<30x256xf32> -> vector<30x256xf32>
    %c0_3 = arith.constant 0 : index
    %c0_4 = arith.constant 0 : index
    %3 = vector.load %arg3[%c0_3, %c0_4] : memref<30x1xf32, #tpu.memory_space<vmem>>, vector<30x1xf32>
    %4 = vector.broadcast %3 : vector<30x1xf32> to vector<30x256xf32>
    %5 = arith.addf %2, %4 : vector<30x256xf32>
    %cst_5 = arith.constant 0.000000e+00 : f32
    %6 = vector.broadcast %cst_5 : f32 to vector<30x256xf32>
    %7 = arith.maximumf %5, %6 : vector<30x256xf32>
    %c0_6 = arith.constant 0 : index
    %c0_7 = arith.constant 0 : index
    %8 = vector.load %arg4[%c0_6, %c0_7] : memref<64x30xf32, #tpu.memory_space<vmem>>, vector<64x30xf32>
    %cst_8 = arith.constant dense<0.000000e+00> : vector<64x256xf32>
    %9 = tpu.matmul %8, %7, %cst_8 {dimension_numbers = #tpu.dot_dimension_numbers<[1], [0], [0], [1], [0, 0, 1, 1], [], []>} : vector<64x30xf32>, vector<30x256xf32>, vector<64x256xf32> -> vector<64x256xf32>
    %c0_9 = arith.constant 0 : index
    %c0_10 = arith.constant 0 : index
    %10 = vector.load %arg5[%c0_9, %c0_10] : memref<64x1xf32, #tpu.memory_space<vmem>>, vector<64x1xf32>
    %11 = vector.broadcast %10 : vector<64x1xf32> to vector<64x256xf32>
    %12 = arith.addf %9, %11 : vector<64x256xf32>
    %cst_11 = arith.constant 0.000000e+00 : f32
    %13 = vector.broadcast %cst_11 : f32 to vector<64x256xf32>
    %14 = arith.maximumf %12, %13 : vector<64x256xf32>
    %c0_12 = arith.constant 0 : index
    %c0_13 = arith.constant 0 : index
    %15 = vector.load %arg6[%c0_12, %c0_13] : memref<16x64xf32, #tpu.memory_space<vmem>>, vector<16x64xf32>
    %cst_14 = arith.constant dense<0.000000e+00> : vector<16x256xf32>
    %16 = tpu.matmul %15, %14, %cst_14 {dimension_numbers = #tpu.dot_dimension_numbers<[1], [0], [0], [1], [0, 0, 1, 1], [], []>} : vector<16x64xf32>, vector<64x256xf32>, vector<16x256xf32> -> vector<16x256xf32>
    %c0_15 = arith.constant 0 : index
    %c0_16 = arith.constant 0 : index
    %17 = vector.load %arg7[%c0_15, %c0_16] : memref<16x1xf32, #tpu.memory_space<vmem>>, vector<16x1xf32>
    %18 = vector.broadcast %17 : vector<16x1xf32> to vector<16x256xf32>
    %19 = arith.addf %16, %18 : vector<16x256xf32>
    %cst_17 = arith.constant 0.000000e+00 : f32
    %20 = vector.broadcast %cst_17 : f32 to vector<16x256xf32>
    %21 = arith.maximumf %19, %20 : vector<16x256xf32>
    %c0_18 = arith.constant 0 : index
    %c0_19 = arith.constant 0 : index
    %22 = vector.load %arg8[%c0_18, %c0_19] : memref<16x1xf32, #tpu.memory_space<vmem>>, vector<16x1xf32>
    %23 = vector.broadcast %22 : vector<16x1xf32> to vector<16x256xf32>
    %24 = arith.mulf %23, %21 : vector<16x256xf32>
    %cst_20 = arith.constant dense<0.000000e+00> : vector<256xf32>
    %25 = vector.multi_reduction <add>, %24, %cst_20 [0] : vector<16x256xf32> to vector<256xf32>
    %26 = vector.shape_cast %25 : vector<256xf32> to vector<1x256xf32>
    %c0_21 = arith.constant 0 : index
    %c0_22 = arith.constant 0 : index
    %27 = vector.load %arg9[%c0_21, %c0_22] : memref<1x1xf32, #tpu.memory_space<vmem>>, vector<1x1xf32>
    %28 = vector.broadcast %27 : vector<1x1xf32> to vector<1x256xf32>
    %29 = arith.addf %26, %28 : vector<1x256xf32>
    %cst_23 = arith.constant 0.000000e+00 : f32
    %30 = vector.broadcast %cst_23 : f32 to vector<1x256xf32>
    %31 = arith.subf %30, %29 : vector<1x256xf32>
    %32 = math.exp %31 : vector<1x256xf32>
    %cst_24 = arith.constant 1.000000e+00 : f32
    %33 = vector.broadcast %cst_24 : f32 to vector<1x256xf32>
    %34 = arith.addf %33, %32 : vector<1x256xf32>
    %cst_25 = arith.constant 1.000000e+00 : f32
    %35 = vector.broadcast %cst_25 : f32 to vector<1x256xf32>
    %36 = arith.divf %35, %34 : vector<1x256xf32>
    %c0_26 = arith.constant 0 : index
    %c0_27 = arith.constant 0 : index
    %37 = vector.load %arg10[%c0_26, %c0_27] : memref<1x256xf32, #tpu.memory_space<vmem>>, vector<1x256xf32>
    tpu.vector_store %arg10[%c0_26, %c0_27], %36 {strides = array<i32>} : memref<1x256xf32, #tpu.memory_space<vmem>>, vector<1x256xf32>,
    return
  }
  func.func @transform_0(%arg0: i32) -> (i32, i32) {
    %c0_i32 = arith.constant 0 : i32
    %c0_i32_0 = arith.constant 0 : i32
    return %c0_i32, %arg0 : i32, i32
  }
  func.func @transform_1(%arg0: i32) -> (i32, i32) {
    %c0_i32 = arith.constant 0 : i32
    %c0_i32_0 = arith.constant 0 : i32
    %c0_i32_1 = arith.constant 0 : i32
    return %c0_i32, %c0_i32_0 : i32, i32
  }
  func.func @transform_2(%arg0: i32) -> (i32, i32) {
    %c0_i32 = arith.constant 0 : i32
    %c0_i32_0 = arith.constant 0 : i32
    %c0_i32_1 = arith.constant 0 : i32
    return %c0_i32, %c0_i32_0 : i32, i32
  }
  func.func @transform_3(%arg0: i32) -> (i32, i32) {
    %c0_i32 = arith.constant 0 : i32
    %c0_i32_0 = arith.constant 0 : i32
    %c0_i32_1 = arith.constant 0 : i32
    return %c0_i32, %c0_i32_0 : i32, i32
  }
  func.func @transform_4(%arg0: i32) -> (i32, i32) {
    %c0_i32 = arith.constant 0 : i32
    %c0_i32_0 = arith.constant 0 : i32
    %c0_i32_1 = arith.constant 0 : i32
    return %c0_i32, %c0_i32_0 : i32, i32
  }
  func.func @transform_5(%arg0: i32) -> (i32, i32) {
    %c0_i32 = arith.constant 0 : i32
    %c0_i32_0 = arith.constant 0 : i32
    %c0_i32_1 = arith.constant 0 : i32
    return %c0_i32, %c0_i32_0 : i32, i32
  }
  func.func @transform_6(%arg0: i32) -> (i32, i32) {
    %c0_i32 = arith.constant 0 : i32
    %c0_i32_0 = arith.constant 0 : i32
    %c0_i32_1 = arith.constant 0 : i32
    return %c0_i32, %c0_i32_0 : i32, i32
  }
  func.func @transform_7(%arg0: i32) -> (i32, i32) {
    %c0_i32 = arith.constant 0 : i32
    %c0_i32_0 = arith.constant 0 : i32
    %c0_i32_1 = arith.constant 0 : i32
    return %c0_i32, %c0_i32_0 : i32, i32
  }
  func.func @transform_8(%arg0: i32) -> (i32, i32) {
    %c0_i32 = arith.constant 0 : i32
    %c0_i32_0 = arith.constant 0 : i32
    %c0_i32_1 = arith.constant 0 : i32
    return %c0_i32, %c0_i32_0 : i32, i32
  }
  func.func @transform_9(%arg0: i32) -> (i32, i32) {
    %c0_i32 = arith.constant 0 : i32
    %c0_i32_0 = arith.constant 0 : i32
    return %c0_i32, %arg0 : i32, i32
  }
}

</mosaic_0001>

<llo_original>
// kernel: tpu_custom_call.1
$region0: #{tpu_custom_call.1}
  #allocation0 [shape = 'u32[]', space=smem, size = 0x4, offset = 0x4, fixed_abs, tag = 'smem constant byte address 0x4 - core index']
  #allocation1 [shape = 'u32[144,128]{1,0:T(1,128)}', space=vmem, size = 0x12000, scoped, tag = 'internal scratch']
  #allocation2 [shape = 'f32[1,1]{1,0:T(1,128)S(1)}', space=vmem, size = 0x200, scoped, tag = 'scoped memory for tpu_custom_call.1']
  %s0 = inlined_call_operand.vmem [shape: f32[5,1024], index: 0, kind: input, shape index: {}]
  %s1 = inlined_call_operand.vmem [shape: f32[30,5], index: 1, kind: input, shape index: {}]
  %s2 = inlined_call_operand.vmem [shape: f32[30,1], index: 2, kind: input, shape index: {}]
  %s3 = inlined_call_operand.vmem [shape: f32[64,30], index: 3, kind: input, shape index: {}]
  %s4 = inlined_call_operand.vmem [shape: f32[64,1], index: 4, kind: input, shape index: {}]
  %s5 = inlined_call_operand.vmem [shape: f32[16,64], index: 5, kind: input, shape index: {}]
  %s6 = inlined_call_operand.vmem [shape: f32[16,1], index: 6, kind: input, shape index: {}]
  %s7 = inlined_call_operand.vmem [shape: f32[16,1], index: 7, kind: input, shape index: {}]
  %s8 = inlined_call_operand.<no memory space> [shape: f32[1,1], index: 8, kind: input, shape index: {}]
  %s9 = inlined_call_operand.hbm [shape: f32[1,1024], index: 9, kind: output, shape index: {}]
  %s10 = sld [smem:[#allocation0]]
  $region69: #{tpu_custom_call.1} parent=0
    _
  %s12 = ssub.s32 1, %s10
  %s13 = scalar_select 0, %s12, %s10
  %v14 = vstv %s8
  %15 = vst [vmem:[#allocation2] sm:$0x1] %v14
  $region1: #{tpu_custom_call.1} parent=0
    #allocation3 [shape = 'u8[2048]{0}', space=vmem, size = 0x800, scoped, tag = 'output window, operand 0']
    #allocation4 [shape = 's32[2]{0}', space=sflag, size = 0x8, scoped, tag = 'scoped memory for tpu_custom_call.1']
    %16 = vsyncpa [#allocation4], 0
    %s17 = scalar_lea.sflag [#allocation4], 1
    %18 = vsyncpa %s17, 0
    loop: start=0, step=1, limit=6
    $region2: #{tpu_custom_call.1} parent=1 // loop_pre_header
      _
    $region3: #{tpu_custom_call.1} parent=1 // loop_header
      %s20 = sphi 0, %s24
      %p21 = scmp.ge.s32.totalorder %s20, 6
      %s30 = sphi 0, %s32
      %s33 = sphi 0, %s30
      %s34 = sphi 0, %s33
      %s50 = sphi 0, %s34
      %s54 = sphi 0, %s54
      %s56 = sphi 0, %s54
      %s57 = sphi 0, %s56
      %s71 = sphi 0, %s57
      %s75 = sphi 0, %s75
      %s77 = sphi 0, %s75
      %s78 = sphi 0, %s77
      %s92 = sphi 0, %s78
      %s96 = sphi 0, %s96
      %s98 = sphi 0, %s96
      %s99 = sphi 0, %s98
      %s113 = sphi 0, %s99
      %s117 = sphi 0, %s117
      %s119 = sphi 0, %s117
      %s120 = sphi 0, %s119
      %s134 = sphi 0, %s120
      %s138 = sphi 0, %s138
      %s140 = sphi 0, %s138
      %s141 = sphi 0, %s140
      %s155 = sphi 0, %s141
      %s159 = sphi 0, %s159
      %s161 = sphi 0, %s159
      %s162 = sphi 0, %s161
      %s176 = sphi 0, %s162
      %s180 = sphi 0, %s180
      %s182 = sphi 0, %s180
      %s183 = sphi 0, %s182
      %s197 = sphi 0, %s183
      %s201 = sphi 0, %s201
      %s203 = sphi 0, %s201
      %s204 = sphi 0, %s203
      %s218 = sphi 0, %s204
      %s224 = sphi 0, %s226
      %s227 = sphi 0, %s224
      %s228 = sphi 0, %s227
      %s244 = sphi 0, %s228
    $region4: #{tpu_custom_call.1} parent=1 // loop_header_branch
      %23 = sbr.rel (%p21) target = $region8
    $region5: #{tpu_custom_call.1} parent=1 // loop_body
      %s25 = ssub.s32 %s20, 1
      %s26 = ssub.s32 %s20, 2
      %s27 = sadd.s32 %s20, 1
      %s28 = ssub.s32 %s20, %s27
      %p29 = scmp.eq.s32.totalorder %s28, 0
      %s31 = sadd.s32 %s30, 1
      %s32 = scalar_select %p29, %s30, %s31
      %p35 = pneg %p29
      %p36 = scmp.eq.s32.totalorder %s20, 3
      %p37 = por %p35, %p36
      %p38 = scmp.ne.s32.totalorder %s30, %s33
      %p39 = scmp.eq.s32.totalorder %s20, 0
      %p40 = por %p38, %p39
      %p41 = scmp.ne.s32.totalorder %s30, %s33
      %p42 = scmp.eq.s32.totalorder %s25, 3
      %p43 = por %p41, %p42
      %p44 = scmp.ne.s32.totalorder %s33, %s34
      %p45 = scmp.eq.s32.totalorder %s25, 0
      %p46 = por %p44, %p45
      %p47 = scmp.ne.s32.totalorder %s33, %s34
      %p48 = scmp.eq.s32.totalorder %s26, 3
      %p49 = por %p47, %p48
      %p51 = scmp.ne.s32.totalorder %s34, %s50
      %p52 = scmp.eq.s32.totalorder %s26, 0
      %p53 = por %p51, %p52
      %s55 = sadd.s32 %s54, 1
      %p58 = scmp.eq.s32.totalorder %s20, 3
      %p59 = scmp.ne.s32.totalorder %s54, %s56
      %p60 = scmp.eq.s32.totalorder %s20, 0
      %p61 = por %p59, %p60
      %p62 = scmp.ne.s32.totalorder %s54, %s56
      %p63 = scmp.eq.s32.totalorder %s25, 3
      %p64 = por %p62, %p63
      %p65 = scmp.ne.s32.totalorder %s56, %s57
      %p66 = scmp.eq.s32.totalorder %s25, 0
      %p67 = por %p65, %p66
      %p68 = scmp.ne.s32.totalorder %s56, %s57
      %p69 = scmp.eq.s32.totalorder %s26, 3
      %p70 = por %p68, %p69
      %p72 = scmp.ne.s32.totalorder %s57, %s71
      %p73 = scmp.eq.s32.totalorder %s26, 0
      %p74 = por %p72, %p73
      %s76 = sadd.s32 %s75, 1
      %p79 = scmp.eq.s32.totalorder %s20, 3
      %p80 = scmp.ne.s32.totalorder %s75, %s77
      %p81 = scmp.eq.s32.totalorder %s20, 0
      %p82 = por %p80, %p81
      %p83 = scmp.ne.s32.totalorder %s75, %s77
      %p84 = scmp.eq.s32.totalorder %s25, 3
      %p85 = por %p83, %p84
      %p86 = scmp.ne.s32.totalorder %s77, %s78
      %p87 = scmp.eq.s32.totalorder %s25, 0
      %p88 = por %p86, %p87
      %p89 = scmp.ne.s32.totalorder %s77, %s78
      %p90 = scmp.eq.s32.totalorder %s26, 3
      %p91 = por %p89, %p90
      %p93 = scmp.ne.s32.totalorder %s78, %s92
      %p94 = scmp.eq.s32.totalorder %s26, 0
      %p95 = por %p93, %p94
      %s97 = sadd.s32 %s96, 1
      %p100 = scmp.eq.s32.totalorder %s20, 3
      %p101 = scmp.ne.s32.totalorder %s96, %s98
      %p102 = scmp.eq.s32.totalorder %s20, 0
      %p103 = por %p101, %p102
      %p104 = scmp.ne.s32.totalorder %s96, %s98
      %p105 = scmp.eq.s32.totalorder %s25, 3
      %p106 = por %p104, %p105
      %p107 = scmp.ne.s32.totalorder %s98, %s99
      %p108 = scmp.eq.s32.totalorder %s25, 0
      %p109 = por %p107, %p108
      %p110 = scmp.ne.s32.totalorder %s98, %s99
      %p111 = scmp.eq.s32.totalorder %s26, 3
      %p112 = por %p110, %p111
      %p114 = scmp.ne.s32.totalorder %s99, %s113
      %p115 = scmp.eq.s32.totalorder %s26, 0
      %p116 = por %p114, %p115
      %s118 = sadd.s32 %s117, 1
      %p121 = scmp.eq.s32.totalorder %s20, 3
      %p122 = scmp.ne.s32.totalorder %s117, %s119
      %p123 = scmp.eq.s32.totalorder %s20, 0
      %p124 = por %p122, %p123
      %p125 = scmp.ne.s32.totalorder %s117, %s119
      %p126 = scmp.eq.s32.totalorder %s25, 3
      %p127 = por %p125, %p126
      %p128 = scmp.ne.s32.totalorder %s119, %s120
      %p129 = scmp.eq.s32.totalorder %s25, 0
      %p130 = por %p128, %p129
      %p131 = scmp.ne.s32.totalorder %s119, %s120
      %p132 = scmp.eq.s32.totalorder %s26, 3
      %p133 = por %p131, %p132
      %p135 = scmp.ne.s32.totalorder %s120, %s134
      %p136 = scmp.eq.s32.totalorder %s26, 0
      %p137 = por %p135, %p136
      %s139 = sadd.s32 %s138, 1
      %p142 = scmp.eq.s32.totalorder %s20, 3
      %p143 = scmp.ne.s32.totalorder %s138, %s140
      %p144 = scmp.eq.s32.totalorder %s20, 0
      %p145 = por %p143, %p144
      %p146 = scmp.ne.s32.totalorder %s138, %s140
      %p147 = scmp.eq.s32.totalorder %s25, 3
      %p148 = por %p146, %p147
      %p149 = scmp.ne.s32.totalorder %s140, %s141
      %p150 = scmp.eq.s32.totalorder %s25, 0
      %p151 = por %p149, %p150
      %p152 = scmp.ne.s32.totalorder %s140, %s141
      %p153 = scmp.eq.s32.totalorder %s26, 3
      %p154 = por %p152, %p153
      %p156 = scmp.ne.s32.totalorder %s141, %s155
      %p157 = scmp.eq.s32.totalorder %s26, 0
      %p158 = por %p156, %p157
      %s160 = sadd.s32 %s159, 1
      %p163 = scmp.eq.s32.totalorder %s20, 3
      %p164 = scmp.ne.s32.totalorder %s159, %s161
      %p165 = scmp.eq.s32.totalorder %s20, 0
      %p166 = por %p164, %p165
      %p167 = scmp.ne.s32.totalorder %s159, %s161
      %p168 = scmp.eq.s32.totalorder %s25, 3
      %p169 = por %p167, %p168
      %p170 = scmp.ne.s32.totalorder %s161, %s162
      %p171 = scmp.eq.s32.totalorder %s25, 0
      %p172 = por %p170, %p171
      %p173 = scmp.ne.s32.totalorder %s161, %s162
      %p174 = scmp.eq.s32.totalorder %s26, 3
      %p175 = por %p173, %p174
      %p177 = scmp.ne.s32.totalorder %s162, %s176
      %p178 = scmp.eq.s32.totalorder %s26, 0
      %p179 = por %p177, %p178
      %s181 = sadd.s32 %s180, 1
      %p184 = scmp.eq.s32.totalorder %s20, 3
      %p185 = scmp.ne.s32.totalorder %s180, %s182
      %p186 = scmp.eq.s32.totalorder %s20, 0
      %p187 = por %p185, %p186
      %p188 = scmp.ne.s32.totalorder %s180, %s182
      %p189 = scmp.eq.s32.totalorder %s25, 3
      %p190 = por %p188, %p189
      %p191 = scmp.ne.s32.totalorder %s182, %s183
      %p192 = scmp.eq.s32.totalorder %s25, 0
      %p193 = por %p191, %p192
      %p194 = scmp.ne.s32.totalorder %s182, %s183
      %p195 = scmp.eq.s32.totalorder %s26, 3
      %p196 = por %p194, %p195
      %p198 = scmp.ne.s32.totalorder %s183, %s197
      %p199 = scmp.eq.s32.totalorder %s26, 0
      %p200 = por %p198, %p199
      %s202 = sadd.s32 %s201, 1
      %p205 = scmp.eq.s32.totalorder %s20, 3
      %p206 = scmp.ne.s32.totalorder %s201, %s203
      %p207 = scmp.eq.s32.totalorder %s20, 0
      %p208 = por %p206, %p207
      %p209 = scmp.ne.s32.totalorder %s201, %s203
      %p210 = scmp.eq.s32.totalorder %s25, 3
      %p211 = por %p209, %p210
      %p212 = scmp.ne.s32.totalorder %s203, %s204
      %p213 = scmp.eq.s32.totalorder %s25, 0
      %p214 = por %p212, %p213
      %p215 = scmp.ne.s32.totalorder %s203, %s204
      %p216 = scmp.eq.s32.totalorder %s26, 3
      %p217 = por %p215, %p216
      %p219 = scmp.ne.s32.totalorder %s204, %s218
      %p220 = scmp.eq.s32.totalorder %s26, 0
      %p221 = por %p219, %p220
      %s222 = ssub.s32 %s20, %s27
      %p223 = scmp.eq.s32.totalorder %s222, 0
      %s225 = sadd.s32 %s224, 1
      %s226 = scalar_select %p223, %s224, %s225
      %p229 = pneg %p223
      %p230 = scmp.eq.s32.totalorder %s20, 3
      %p231 = por %p229, %p230
      %p232 = scmp.ne.s32.totalorder %s224, %s227
      %p233 = scmp.eq.s32.totalorder %s20, 0
      %p234 = por %p232, %p233
      %p235 = scmp.ne.s32.totalorder %s224, %s227
      %p236 = scmp.eq.s32.totalorder %s25, 3
      %p237 = por %p235, %p236
      %p238 = scmp.ne.s32.totalorder %s227, %s228
      %p239 = scmp.eq.s32.totalorder %s25, 0
      %p240 = por %p238, %p239
      %p241 = scmp.ne.s32.totalorder %s227, %s228
      %p242 = scmp.eq.s32.totalorder %s26, 3
      %p243 = por %p241, %p242
      %p245 = scmp.ne.s32.totalorder %s228, %s244
      %p246 = scmp.eq.s32.totalorder %s26, 0
      %p247 = por %p245, %p246
      %p248 = scmp.le.s32.totalorder 1, %s20
      %p249 = scmp.lt.s32.totalorder %s20, 5
      %p250 = pnand %p248, %p249
      %p251 = pneg %p250
      // Predicated region
      $region9: #{tpu_custom_call.1} parent=5 // pred_check
        _
      $region10: #{tpu_custom_call.1} parent=5 // pred_check_branch
        %253 = sbr.rel (%p250) target = $region12
      $region11: #{tpu_custom_call.1} parent=5 // pred_region
        %s254 = ssub.s32 %s20, 1
        // Predicated region
        $region13: #{tpu_custom_call.1} parent=11 // pred_check
          %p255 = pneg %p67
        $region14: #{tpu_custom_call.1} parent=11 // pred_check_branch
          %257 = sbr.rel (%p255) target = $region16
        $region15: #{tpu_custom_call.1} parent=11 // pred_region
          _
        $region16: #{tpu_custom_call.1} parent=11 // pred_fallthru
          _
        // Predicated region
        $region17: #{tpu_custom_call.1} parent=11 // pred_check
          %p258 = pneg %p88
        $region18: #{tpu_custom_call.1} parent=11 // pred_check_branch
          %260 = sbr.rel (%p258) target = $region20
        $region19: #{tpu_custom_call.1} parent=11 // pred_region
          _
        $region20: #{tpu_custom_call.1} parent=11 // pred_fallthru
          _
        // Predicated region
        $region21: #{tpu_custom_call.1} parent=11 // pred_check
          %p261 = pneg %p109
        $region22: #{tpu_custom_call.1} parent=11 // pred_check_branch
          %263 = sbr.rel (%p261) target = $region24
        $region23: #{tpu_custom_call.1} parent=11 // pred_region
          _
        $region24: #{tpu_custom_call.1} parent=11 // pred_fallthru
          _
        // Predicated region
        $region25: #{tpu_custom_call.1} parent=11 // pred_check
          %p264 = pneg %p130
        $region26: #{tpu_custom_call.1} parent=11 // pred_check_branch
          %266 = sbr.rel (%p264) target = $region28
        $region27: #{tpu_custom_call.1} parent=11 // pred_region
          _
        $region28: #{tpu_custom_call.1} parent=11 // pred_fallthru
          _
        // Predicated region
        $region29: #{tpu_custom_call.1} parent=11 // pred_check
          %p267 = pneg %p151
        $region30: #{tpu_custom_call.1} parent=11 // pred_check_branch
          %269 = sbr.rel (%p267) target = $region32
        $region31: #{tpu_custom_call.1} parent=11 // pred_region
          _
        $region32: #{tpu_custom_call.1} parent=11 // pred_fallthru
          _
        // Predicated region
        $region33: #{tpu_custom_call.1} parent=11 // pred_check
          %p270 = pneg %p172
        $region34: #{tpu_custom_call.1} parent=11 // pred_check_branch
          %272 = sbr.rel (%p270) target = $region36
        $region35: #{tpu_custom_call.1} parent=11 // pred_region
          _
        $region36: #{tpu_custom_call.1} parent=11 // pred_fallthru
          _
        // Predicated region
        $region37: #{tpu_custom_call.1} parent=11 // pred_check
          %p273 = pneg %p193
        $region38: #{tpu_custom_call.1} parent=11 // pred_check_branch
          %275 = sbr.rel (%p273) target = $region40
        $region39: #{tpu_custom_call.1} parent=11 // pred_region
          _
        $region40: #{tpu_custom_call.1} parent=11 // pred_fallthru
          _
        // Predicated region
        $region41: #{tpu_custom_call.1} parent=11 // pred_check
          %p276 = pneg %p214
        $region42: #{tpu_custom_call.1} parent=11 // pred_check_branch
          %278 = sbr.rel (%p276) target = $region44
        $region43: #{tpu_custom_call.1} parent=11 // pred_region
          _
        $region44: #{tpu_custom_call.1} parent=11 // pred_fallthru
          _
      $region12: #{tpu_custom_call.1} parent=5 // pred_fallthru
        _
      %p279 = scmp.lt.s32.totalorder %s20, 4
      // Predicated region
      $region45: #{tpu_custom_call.1} parent=5 // pred_check
        %p280 = pneg %p279
      $region46: #{tpu_custom_call.1} parent=5 // pred_check_branch
        %282 = sbr.rel (%p280) target = $region48
      $region47: #{tpu_custom_call.1} parent=5 // pred_region
        // Predicated region
        $region49: #{tpu_custom_call.1} parent=47 // pred_check
          %p283 = pneg %p40
        $region50: #{tpu_custom_call.1} parent=47 // pred_check_branch
          %285 = sbr.rel (%p283) target = $region52
        $region51: #{tpu_custom_call.1} parent=47 // pred_region
          %s286 = smul.u32 2, %s20
          %p287 = scmp.lt.s32.totalorder %s286, 7
          %s288 = scalar_select %p287, %s286, 7
          %s289 = smul.addr %s288, 8
          %s290 = scalar_lea.vmem %s0, %s289
          %s291 = smul.u32 2, %s20
        $region52: #{tpu_custom_call.1} parent=47 // pred_fallthru
          _
      $region48: #{tpu_custom_call.1} parent=5 // pred_fallthru
        _
      %p292 = scmp.le.s32.totalorder 1, %s20
      %p293 = scmp.lt.s32.totalorder %s20, 5
      %p294 = pnand %p292, %p293
      %p295 = pneg %p294
      // Predicated region
      $region53: #{tpu_custom_call.1} parent=5 // pred_check
        _
      $region54: #{tpu_custom_call.1} parent=5 // pred_check_branch
        %297 = sbr.rel (%p294) target = $region56
      $region55: #{tpu_custom_call.1} parent=5 // pred_region
        %s298 = ssub.s32 %s20, 1
        %s299 = smul.u32 2, %s25
        %p300 = scmp.lt.s32.totalorder %s299, 7
        %s301 = scalar_select %p300, %s299, 7
        %s302 = smul.addr %s301, 8
        %s303 = scalar_lea.vmem %s0, %s302
        %p304 = pneg %p46
        %p305 = pneg %p43
        %p306 = pneg %p67
        %p307 = pneg %p64
        %p308 = pneg %p88
        %p309 = pneg %p85
        %p310 = pneg %p109
        %p311 = pneg %p106
        %p312 = pneg %p130
        %p313 = pneg %p127
        %p314 = pneg %p151
        %p315 = pneg %p148
        %p316 = pneg %p172
        %p317 = pneg %p169
        %p318 = pneg %p193
        %p319 = pneg %p190
        %p320 = pneg %p214
        %p321 = pneg %p211
        %p322 = pneg %p240
        %p323 = pneg %p237
        %s324 = sand.u32 %s227, 1
        %s325 = scalar_lea.sflag [#allocation4], %s324
        %s326 = sand.u32 %s227, 1
        %s327 = smul.addr %s326, 2
        %s328 = scalar_lea.vmem [#allocation3], %s327
        %s329 = smul.u32 2, %s25
        %p330 = scmp.lt.s32.totalorder %s329, 7
        %s331 = scalar_select %p330, %s329, 7
        %s332 = smul.addr %s331, 8
        %s333 = scalar_lea.vmem %s0, %s332
        %s334 = smul.u32 2, %s25
        %s335 = smul.u32 2, %s25
        %v336 = vld [vmem:[%s333] sm:$0x1f]
        %v337 = vld [vmem:[%s333 + $0x8] sm:$0x1f]
        %v338 = vld [vmem:[%s1] sm:$0xff]
        %v339 = vld [vmem:[%s1 + $0x8] sm:$0xff]
        %v340 = vld [vmem:[%s1 + $0x10] sm:$0xff]
        %v341 = vld [vmem:[%s1 + $0x18] sm:$0x3f]
        %v342 = vld [vmem:[%s2] sm:$0xff]
        %v343 = vld [vmem:[%s2 + $0x8] sm:$0xff]
        %v344 = vld [vmem:[%s2 + $0x10] sm:$0xff]
        %v345 = vld [vmem:[%s2 + $0x18] sm:$0x3f]
        %347 = vset.pattern.permute.xlu0 0
        %348 = vperm.xlu0 %347, %v342
        %v349 = vpop.permute.xlu0 %348
        %352 = vset.pattern.permute.xlu0 0
        %353 = vperm.xlu0 %352, %v343
        %v354 = vpop.permute.xlu0 %353
        %357 = vset.pattern.permute.xlu0 0
        %358 = vperm.xlu0 %357, %v344
        %v359 = vpop.permute.xlu0 %358
        %362 = vset.pattern.permute.xlu0 0
        %363 = vperm.xlu0 %362, %v345
        %v364 = vpop.permute.xlu0 %363
        %vm366 = vcmask 39936
        %v368 = vsel %vm366, %v338, 0
        %v371 = vsel %vm366, %v339, 0
        %v374 = vsel %vm366, %v340, 0
        %v377 = vsel %vm366, %v341, 0
        %vm379 = vcmask 1044480
        %v381 = vsel %vm379, %v336, 0
        %v384 = vsel %vm379, %v337, 0
        %386 = vmatprep.subr.mxu0 0.0
        %387 = vmatpush1.msra.mxu0 0.0
        %388 = vmatprep.subr.mxu0 0.0
        %389 = vmatpush1.msra.mxu0 0.0
        %390 = vmatprep.subr.mxu0 0.0
        %391 = vmatpush1.msra.mxu0 0.0
        %392 = vmatprep.subr.mxu0 0.0
        %393 = vmatpush1.msra.mxu0 0.0
        %394 = vmatprep.subr.mxu0 0.0
        %395 = vmatpush1.msra.mxu0 0.0
        %396 = vmatprep.subr.mxu0 0.0
        %397 = vmatpush1.msra.mxu0 0.0
        %398 = vmatprep.subr.mxu0 0.0
        %399 = vmatpush1.msra.mxu0 0.0
        %400 = vmatprep.subr.mxu0 0.0
        %401 = vmatpush1.msra.mxu0 0.0
        %402 = vmatprep.subr.mxu0 0.0
        %403 = vmatpush1.msra.mxu0 0.0
        %404 = vmatprep.subr.mxu0 0.0
        %405 = vmatpush1.msra.mxu0 0.0
        %406 = vmatprep.subr.mxu0 0.0
        %407 = vmatpush1.msra.mxu0 0.0
        %408 = vmatprep.subr.mxu0 0.0
        %409 = vmatpush1.msra.mxu0 0.0
        %410 = vmatprep.subr.mxu0 0.0
        %411 = vmatpush1.msra.mxu0 0.0
        %412 = vmatprep.subr.mxu0 0.0
        %413 = vmatpush1.msra.mxu0 0.0
        %414 = vmatprep.subr.mxu0 0.0
        %415 = vmatpush1.msra.mxu0 0.0
        %416 = vmatprep.subr.mxu0 %v384
        %417 = vmatpush1.msra.mxu0 %v381
        %418 = vmatprep.subr.mxu0 0.0
        %419 = vmatpush2.msra.mxu0 0.0
        %420 = vmatprep.subr.mxu0 0.0
        %421 = vmatpush2.msra.mxu0 0.0
        %422 = vmatprep.subr.mxu0 0.0
        %423 = vmatpush2.msra.mxu0 0.0
        %424 = vmatprep.subr.mxu0 0.0
        %425 = vmatpush2.msra.mxu0 0.0
        %426 = vmatprep.subr.mxu0 0.0
        %427 = vmatpush2.msra.mxu0 0.0
        %428 = vmatprep.subr.mxu0 0.0
        %429 = vmatpush2.msra.mxu0 0.0
        %430 = vmatprep.subr.mxu0 0.0
        %431 = vmatpush2.msra.mxu0 0.0
        %432 = vmatprep.subr.mxu0 0.0
        %433 = vmatpush2.msra.mxu0 0.0
        %434 = vmatprep.subr.mxu0 0.0
        %435 = vmatpush2.msra.mxu0 0.0
        %436 = vmatprep.subr.mxu0 0.0
        %437 = vmatpush2.msra.mxu0 0.0
        %438 = vmatprep.subr.mxu0 0.0
        %439 = vmatpush2.msra.mxu0 0.0
        %440 = vmatprep.subr.mxu0 0.0
        %441 = vmatpush2.msra.mxu0 0.0
        %442 = vmatprep.subr.mxu0 0.0
        %443 = vmatpush2.msra.mxu0 0.0
        %444 = vmatprep.subr.mxu0 0.0
        %445 = vmatpush2.msra.mxu0 0.0
        %446 = vmatprep.subr.mxu0 0.0
        %447 = vmatpush2.msra.mxu0 0.0
        %448 = vmatprep.subr.mxu0 0.0
        %449 = vmatpush2.msra.mxu0 0.0
        %450 = vmatprep.mubr.f32.mxu0 0.0
        %451 = vmatmul.mubr.f32.gmra.mxu0 %v368
        %v452 = vpop.f32.mrf.mxu0
        %v453 = vadd.f32 %v349, %v452
        %v454 = vpop.f32.mrf.mxu0
        %v455 = vadd.f32 %v349, %v454
        %456 = vmatprep.mubr.f32.mxu0 0.0
        %457 = vmatmul.mubr.f32.gmra.mxu0 %v371
        %v458 = vpop.f32.mrf.mxu0
        %v459 = vadd.f32 %v354, %v458
        %v460 = vpop.f32.mrf.mxu0
        %v461 = vadd.f32 %v354, %v460
        %462 = vmatprep.mubr.f32.mxu0 0.0
        %463 = vmatmul.mubr.f32.gmra.mxu0 %v374
        %v464 = vpop.f32.mrf.mxu0
        %v465 = vadd.f32 %v359, %v464
        %v466 = vpop.f32.mrf.mxu0
        %v467 = vadd.f32 %v359, %v466
        %468 = vmatprep.mubr.f32.mxu0 0.0
        %469 = vmatmul.mubr.f32.gmra.mxu0 %v377
        %v470 = vpop.f32.mrf.mxu0
        %v471 = vadd.f32 %v364, %v470
        %v472 = vpop.f32.mrf.mxu0
        %v473 = vadd.f32 %v364, %v472
        %474 = vdwg.mxu0
        %v475 = vmax.f32 %v453, 0.0
        %v476 = vmax.f32 %v455, 0.0
        %v477 = vmax.f32 %v459, 0.0
        %v478 = vmax.f32 %v461, 0.0
        %v479 = vmax.f32 %v465, 0.0
        %v480 = vmax.f32 %v467, 0.0
        %v481 = vmax.f32 %v471, 0.0
        %v482 = vmax.f32 %v473, 0.0
        %v483 = vld [vmem:[%s3] sm:$0xff]
        %v484 = vld [vmem:[%s3 + $0x8] sm:$0xff]
        %v485 = vld [vmem:[%s3 + $0x10] sm:$0xff]
        %v486 = vld [vmem:[%s3 + $0x18] sm:$0xff]
        %v487 = vld [vmem:[%s3 + $0x20] sm:$0xff]
        %v488 = vld [vmem:[%s3 + $0x28] sm:$0xff]
        %v489 = vld [vmem:[%s3 + $0x30] sm:$0xff]
        %v490 = vld [vmem:[%s3 + $0x38] sm:$0xff]
        %v491 = vld [vmem:[%s4] sm:$0xff]
        %v492 = vld [vmem:[%s4 + $0x8] sm:$0xff]
        %v493 = vld [vmem:[%s4 + $0x10] sm:$0xff]
        %v494 = vld [vmem:[%s4 + $0x18] sm:$0xff]
        %v495 = vld [vmem:[%s4 + $0x20] sm:$0xff]
        %v496 = vld [vmem:[%s4 + $0x28] sm:$0xff]
        %v497 = vld [vmem:[%s4 + $0x30] sm:$0xff]
        %v498 = vld [vmem:[%s4 + $0x38] sm:$0xff]
        %500 = vset.pattern.permute.xlu0 0
        %501 = vperm.xlu0 %500, %v491
        %v502 = vpop.permute.xlu0 %501
        %505 = vset.pattern.permute.xlu0 0
        %506 = vperm.xlu0 %505, %v492
        %v507 = vpop.permute.xlu0 %506
        %510 = vset.pattern.permute.xlu0 0
        %511 = vperm.xlu0 %510, %v493
        %v512 = vpop.permute.xlu0 %511
        %515 = vset.pattern.permute.xlu0 0
        %516 = vperm.xlu0 %515, %v494
        %v517 = vpop.permute.xlu0 %516
        %520 = vset.pattern.permute.xlu0 0
        %521 = vperm.xlu0 %520, %v495
        %v522 = vpop.permute.xlu0 %521
        %525 = vset.pattern.permute.xlu0 0
        %526 = vperm.xlu0 %525, %v496
        %v527 = vpop.permute.xlu0 %526
        %530 = vset.pattern.permute.xlu0 0
        %531 = vperm.xlu0 %530, %v497
        %v532 = vpop.permute.xlu0 %531
        %535 = vset.pattern.permute.xlu0 0
        %536 = vperm.xlu0 %535, %v498
        %v537 = vpop.permute.xlu0 %536
        %vm539 = vcmask 244736
        %v541 = vsel %vm539, %v483, 0
        %v544 = vsel %vm539, %v484, 0
        %v547 = vsel %vm539, %v485, 0
        %v550 = vsel %vm539, %v486, 0
        %v553 = vsel %vm539, %v487, 0
        %v556 = vsel %vm539, %v488, 0
        %v559 = vsel %vm539, %v489, 0
        %v562 = vsel %vm539, %v490, 0
        %vm564 = vcmask 1045504
        %v566 = vsel %vm564, %v481, 0
        %v569 = vsel %vm564, %v482, 0
        %571 = vmatprep.subr.mxu0 0.0
        %572 = vmatpush1.msra.mxu0 0.0
        %573 = vmatprep.subr.mxu0 0.0
        %574 = vmatpush1.msra.mxu0 0.0
        %575 = vmatprep.subr.mxu0 0.0
        %576 = vmatpush1.msra.mxu0 0.0
        %577 = vmatprep.subr.mxu0 0.0
        %578 = vmatpush1.msra.mxu0 0.0
        %579 = vmatprep.subr.mxu0 0.0
        %580 = vmatpush1.msra.mxu0 0.0
        %581 = vmatprep.subr.mxu0 0.0
        %582 = vmatpush1.msra.mxu0 0.0
        %583 = vmatprep.subr.mxu0 0.0
        %584 = vmatpush1.msra.mxu0 0.0
        %585 = vmatprep.subr.mxu0 0.0
        %586 = vmatpush1.msra.mxu0 0.0
        %587 = vmatprep.subr.mxu0 0.0
        %588 = vmatpush1.msra.mxu0 0.0
        %589 = vmatprep.subr.mxu0 0.0
        %590 = vmatpush1.msra.mxu0 0.0
        %591 = vmatprep.subr.mxu0 0.0
        %592 = vmatpush1.msra.mxu0 0.0
        %593 = vmatprep.subr.mxu0 0.0
        %594 = vmatpush1.msra.mxu0 0.0
        %595 = vmatprep.subr.mxu0 %v569
        %596 = vmatpush1.msra.mxu0 %v566
        %597 = vmatprep.subr.mxu0 %v480
        %598 = vmatpush1.msra.mxu0 %v479
        %599 = vmatprep.subr.mxu0 %v478
        %600 = vmatpush1.msra.mxu0 %v477
        %601 = vmatprep.subr.mxu0 %v476
        %602 = vmatpush1.msra.mxu0 %v475
        %603 = vmatprep.subr.mxu0 0.0
        %604 = vmatpush2.msra.mxu0 0.0
        %605 = vmatprep.subr.mxu0 0.0
        %606 = vmatpush2.msra.mxu0 0.0
        %607 = vmatprep.subr.mxu0 0.0
        %608 = vmatpush2.msra.mxu0 0.0
        %609 = vmatprep.subr.mxu0 0.0
        %610 = vmatpush2.msra.mxu0 0.0
        %611 = vmatprep.subr.mxu0 0.0
        %612 = vmatpush2.msra.mxu0 0.0
        %613 = vmatprep.subr.mxu0 0.0
        %614 = vmatpush2.msra.mxu0 0.0
        %615 = vmatprep.subr.mxu0 0.0
        %616 = vmatpush2.msra.mxu0 0.0
        %617 = vmatprep.subr.mxu0 0.0
        %618 = vmatpush2.msra.mxu0 0.0
        %619 = vmatprep.subr.mxu0 0.0
        %620 = vmatpush2.msra.mxu0 0.0
        %621 = vmatprep.subr.mxu0 0.0
        %622 = vmatpush2.msra.mxu0 0.0
        %623 = vmatprep.subr.mxu0 0.0
        %624 = vmatpush2.msra.mxu0 0.0
        %625 = vmatprep.subr.mxu0 0.0
        %626 = vmatpush2.msra.mxu0 0.0
        %627 = vmatprep.subr.mxu0 0.0
        %628 = vmatpush2.msra.mxu0 0.0
        %629 = vmatprep.subr.mxu0 0.0
        %630 = vmatpush2.msra.mxu0 0.0
        %631 = vmatprep.subr.mxu0 0.0
        %632 = vmatpush2.msra.mxu0 0.0
        %633 = vmatprep.subr.mxu0 0.0
        %634 = vmatpush2.msra.mxu0 0.0
        %635 = vmatprep.mubr.f32.mxu0 0.0
        %636 = vmatmul.mubr.f32.gmra.mxu0 %v541
        %v637 = vpop.f32.mrf.mxu0
        %v638 = vadd.f32 %v502, %v637
        %v639 = vpop.f32.mrf.mxu0
        %v640 = vadd.f32 %v502, %v639
        %641 = vmatprep.mubr.f32.mxu0 0.0
        %642 = vmatmul.mubr.f32.gmra.mxu0 %v544
        %v643 = vpop.f32.mrf.mxu0
        %v644 = vadd.f32 %v507, %v643
        %v645 = vpop.f32.mrf.mxu0
        %v646 = vadd.f32 %v507, %v645
        %647 = vmatprep.mubr.f32.mxu0 0.0
        %648 = vmatmul.mubr.f32.gmra.mxu0 %v547
        %v649 = vpop.f32.mrf.mxu0
        %v650 = vadd.f32 %v512, %v649
        %v651 = vpop.f32.mrf.mxu0
        %v652 = vadd.f32 %v512, %v651
        %653 = vmatprep.mubr.f32.mxu0 0.0
        %654 = vmatmul.mubr.f32.gmra.mxu0 %v550
        %v655 = vpop.f32.mrf.mxu0
        %v656 = vadd.f32 %v517, %v655
        %v657 = vpop.f32.mrf.mxu0
        %v658 = vadd.f32 %v517, %v657
        %659 = vmatprep.mubr.f32.mxu0 0.0
        %660 = vmatmul.mubr.f32.gmra.mxu0 %v553
        %v661 = vpop.f32.mrf.mxu0
        %v662 = vadd.f32 %v522, %v661
        %v663 = vpop.f32.mrf.mxu0
        %v664 = vadd.f32 %v522, %v663
        %665 = vmatprep.mubr.f32.mxu0 0.0
        %666 = vmatmul.mubr.f32.gmra.mxu0 %v556
        %v667 = vpop.f32.mrf.mxu0
        %v668 = vadd.f32 %v527, %v667
        %v669 = vpop.f32.mrf.mxu0
        %v670 = vadd.f32 %v527, %v669
        %671 = vmatprep.mubr.f32.mxu0 0.0
        %672 = vmatmul.mubr.f32.gmra.mxu0 %v559
        %v673 = vpop.f32.mrf.mxu0
        %v674 = vadd.f32 %v532, %v673
        %v675 = vpop.f32.mrf.mxu0
        %v676 = vadd.f32 %v532, %v675
        %677 = vmatprep.mubr.f32.mxu0 0.0
        %678 = vmatmul.mubr.f32.gmra.mxu0 %v562
        %v679 = vpop.f32.mrf.mxu0
        %v680 = vadd.f32 %v537, %v679
        %v681 = vpop.f32.mrf.mxu0
        %v682 = vadd.f32 %v537, %v681
        %683 = vdwg.mxu0
        %v684 = vmax.f32 %v638, 0.0
        %v685 = vmax.f32 %v640, 0.0
        %v686 = vmax.f32 %v644, 0.0
        %v687 = vmax.f32 %v646, 0.0
        %v688 = vmax.f32 %v650, 0.0
        %v689 = vmax.f32 %v652, 0.0
        %v690 = vmax.f32 %v656, 0.0
        %v691 = vmax.f32 %v658, 0.0
        %v692 = vmax.f32 %v662, 0.0
        %v693 = vmax.f32 %v664, 0.0
        %v694 = vmax.f32 %v668, 0.0
        %v695 = vmax.f32 %v670, 0.0
        %v696 = vmax.f32 %v674, 0.0
        %v697 = vmax.f32 %v676, 0.0
        %v698 = vmax.f32 %v680, 0.0
        %v699 = vmax.f32 %v682, 0.0
        %v700 = vld [vmem:[%s5] sm:$0xff]
        %v701 = vld [vmem:[%s5 + $0x8] sm:$0xff]
        %v702 = vld [vmem:[%s6] sm:$0xff]
        %v703 = vld [vmem:[%s6 + $0x8] sm:$0xff]
        %705 = vset.pattern.permute.xlu0 0
        %706 = vperm.xlu0 %705, %v702
        %v707 = vpop.permute.xlu0 %706
        %710 = vset.pattern.permute.xlu0 0
        %711 = vperm.xlu0 %710, %v703
        %v712 = vpop.permute.xlu0 %711
        %vm714 = vcmask 523264
        %v716 = vsel %vm714, %v700, 0
        %v719 = vsel %vm714, %v701, 0
        %721 = vmatprep.subr.mxu0 0.0
        %722 = vmatpush1.msra.mxu0 0.0
        %723 = vmatprep.subr.mxu0 0.0
        %724 = vmatpush1.msra.mxu0 0.0
        %725 = vmatprep.subr.mxu0 0.0
        %726 = vmatpush1.msra.mxu0 0.0
        %727 = vmatprep.subr.mxu0 0.0
        %728 = vmatpush1.msra.mxu0 0.0
        %729 = vmatprep.subr.mxu0 0.0
        %730 = vmatpush1.msra.mxu0 0.0
        %731 = vmatprep.subr.mxu0 0.0
        %732 = vmatpush1.msra.mxu0 0.0
        %733 = vmatprep.subr.mxu0 0.0
        %734 = vmatpush1.msra.mxu0 0.0
        %735 = vmatprep.subr.mxu0 0.0
        %736 = vmatpush1.msra.mxu0 0.0
        %737 = vmatprep.subr.mxu0 %v699
        %738 = vmatpush1.msra.mxu0 %v698
        %739 = vmatprep.subr.mxu0 %v697
        %740 = vmatpush1.msra.mxu0 %v696
        %741 = vmatprep.subr.mxu0 %v695
        %742 = vmatpush1.msra.mxu0 %v694
        %743 = vmatprep.subr.mxu0 %v693
        %744 = vmatpush1.msra.mxu0 %v692
        %745 = vmatprep.subr.mxu0 %v691
        %746 = vmatpush1.msra.mxu0 %v690
        %747 = vmatprep.subr.mxu0 %v689
        %748 = vmatpush1.msra.mxu0 %v688
        %749 = vmatprep.subr.mxu0 %v687
        %750 = vmatpush1.msra.mxu0 %v686
        %751 = vmatprep.subr.mxu0 %v685
        %752 = vmatpush1.msra.mxu0 %v684
        %753 = vmatprep.subr.mxu0 0.0
        %754 = vmatpush2.msra.mxu0 0.0
        %755 = vmatprep.subr.mxu0 0.0
        %756 = vmatpush2.msra.mxu0 0.0
        %757 = vmatprep.subr.mxu0 0.0
        %758 = vmatpush2.msra.mxu0 0.0
        %759 = vmatprep.subr.mxu0 0.0
        %760 = vmatpush2.msra.mxu0 0.0
        %761 = vmatprep.subr.mxu0 0.0
        %762 = vmatpush2.msra.mxu0 0.0
        %763 = vmatprep.subr.mxu0 0.0
        %764 = vmatpush2.msra.mxu0 0.0
        %765 = vmatprep.subr.mxu0 0.0
        %766 = vmatpush2.msra.mxu0 0.0
        %767 = vmatprep.subr.mxu0 0.0
        %768 = vmatpush2.msra.mxu0 0.0
        %769 = vmatprep.subr.mxu0 0.0
        %770 = vmatpush2.msra.mxu0 0.0
        %771 = vmatprep.subr.mxu0 0.0
        %772 = vmatpush2.msra.mxu0 0.0
        %773 = vmatprep.subr.mxu0 0.0
        %774 = vmatpush2.msra.mxu0 0.0
        %775 = vmatprep.subr.mxu0 0.0
        %776 = vmatpush2.msra.mxu0 0.0
        %777 = vmatprep.subr.mxu0 0.0
        %778 = vmatpush2.msra.mxu0 0.0
        %779 = vmatprep.subr.mxu0 0.0
        %780 = vmatpush2.msra.mxu0 0.0
        %781 = vmatprep.subr.mxu0 0.0
        %782 = vmatpush2.msra.mxu0 0.0
        %783 = vmatprep.subr.mxu0 0.0
        %784 = vmatpush2.msra.mxu0 0.0
        %785 = vmatprep.mubr.f32.mxu0 0.0
        %786 = vmatmul.mubr.f32.gmra.mxu0 %v716
        %v787 = vpop.f32.mrf.mxu0
        %v788 = vadd.f32 %v707, %v787
        %v789 = vpop.f32.mrf.mxu0
        %v790 = vadd.f32 %v707, %v789
        %791 = vmatprep.mubr.f32.mxu0 0.0
        %792 = vmatmul.mubr.f32.gmra.mxu0 %v719
        %v793 = vpop.f32.mrf.mxu0
        %v794 = vadd.f32 %v712, %v793
        %v795 = vpop.f32.mrf.mxu0
        %v796 = vadd.f32 %v712, %v795
        %797 = vdwg.mxu0
        %v798 = vmax.f32 %v788, 0.0
        %v799 = vmax.f32 %v790, 0.0
        %v800 = vmax.f32 %v794, 0.0
        %v801 = vmax.f32 %v796, 0.0
        %v802 = vld [vmem:[%s7] sm:$0xff]
        %v803 = vld [vmem:[%s7 + $0x8] sm:$0xff]
        %805 = vset.pattern.permute.xlu0 0
        %806 = vperm.xlu0 %805, %v802
        %v807 = vpop.permute.xlu0 %806
        %810 = vset.pattern.permute.xlu0 0
        %811 = vperm.xlu0 %810, %v803
        %v812 = vpop.permute.xlu0 %811
        %v814 = vmul.f32 %v807, %v798
        %v815 = vmul.f32 %v807, %v799
        %v816 = vmul.f32 %v812, %v800
        %v817 = vmul.f32 %v812, %v801
        %v818 = vadd.f32 %v814, %v816
        %v819 = vrot.slane %v818, 4
        %v820 = vadd.f32 %v818, %v819
        %v821 = vrot.slane %v820, 2
        %v822 = vadd.f32 %v820, %v821
        %v823 = vrot.slane %v822, 1
        %v824 = vadd.f32 %v822, %v823
        %v825 = vadd.f32 %v815, %v817
        %v826 = vrot.slane %v825, 4
        %v827 = vadd.f32 %v825, %v826
        %v828 = vrot.slane %v827, 2
        %v829 = vadd.f32 %v827, %v828
        %v830 = vrot.slane %v829, 1
        %v831 = vadd.f32 %v829, %v830
        %v832 = vld [vmem:[#allocation2] sm:$0x1]
        %834 = vset.pattern.permute.xlu0 0
        %835 = vperm.xlu0 %834, %v832
        %v836 = vpop.permute.xlu0 %835
        %v838 = vlaneseq
        %v839 = vshrl.u32 %v838, 7
        %v840 = vsub.s32 0, %v839
        %v841 = vrot.slane %v836, %v840
        %v842 = vadd.f32 %v824, %v841
        %v843 = vadd.f32 %v831, %v841
        %v844 = vsub.f32 0.0, %v842
        %v845 = vsub.f32 0.0, %v843
        %v846 = vmul.f32 %v844, 1.442695
        %v847 = vpow.pop %v846
        %v848 = vmul.f32 %v845, 1.442695
        %v849 = vpow.pop %v848
        %v850 = vadd.f32 %v847, 1.0
        %v851 = vadd.f32 %v849, 1.0
        %v852 = vrcp.pop %v850
        %v853 = vmul.f32 1.0, %v852
        %v854 = vrcp.pop %v851
        %v855 = vmul.f32 1.0, %v854
        %v858 = vcombine.low %v853, %v855
        %v860 = vunpack.c.l.s4 1966171168
        %v861 = vunpack.c.0.s8 %v860
        %v862 = vlaneseq
        %v863 = vshrl.u32 %v862, 7
        %v864 = vsub.s32 %v861, %v863
        %v865 = vrot.slane %v858, %v864
        %v867 = vunpack.c.l.s4 1966171168
        %v868 = vunpack.c.0.s8 %v867
        %v869 = vlaneseq
        %v870 = vshrl.u32 %v869, 7
        %v871 = vsub.s32 %v868, %v870
        %v872 = vrot.slane %v865, %v871
        %v874 = vlaneseq
        %vm875 = vcmp.ge.s32.totalorder %v874, 0
        %vm876 = vcmp.lt.s32.totalorder %v874, 256
        %vm877 = vmand %vm875, %vm876
        %878 = vst.msk [vmem:[%s328] sm:$0x3] %vm877, %v872
        %s879 = sand.u32 %s227, 1
        %s880 = scalar_lea.sflag [#allocation4], %s879
        %s881 = sand.u32 %s227, 1
        %s882 = smul.addr %s881, 2
        %s883 = scalar_lea.vmem [#allocation3], %s882
        // Predicated region
        $region57: #{tpu_custom_call.1} parent=55 // pred_check
          %p884 = pneg %p237
        $region58: #{tpu_custom_call.1} parent=55 // pred_check_branch
          %886 = sbr.rel (%p884) target = $region60
        $region59: #{tpu_custom_call.1} parent=55 // pred_region
          %s887 = smul.u32 2, %s25
          %s889 = ssub.s32 32, 32
          %890 = vsyncadd %s880, %s889
          %s891 = smul.addr %s887, 16
          %s892 = scalar_lea.hbm %s9, %s891
          %s894 = sshll.u32 %s883, 4
          %s895 = int_to_ptr.vmem [resolvable:$true] %s894
          %897 = dma.vmem_to_hbm [thread:$0]  %s895, 32, %s892, %s880
        $region60: #{tpu_custom_call.1} parent=55 // pred_fallthru
          _
      $region56: #{tpu_custom_call.1} parent=5 // pred_fallthru
        _
      %p898 = scmp.le.s32.totalorder 2, %s20
      // Predicated region
      $region61: #{tpu_custom_call.1} parent=5 // pred_check
        %p899 = pneg %p898
      $region62: #{tpu_custom_call.1} parent=5 // pred_check_branch
        %901 = sbr.rel (%p899) target = $region64
      $region63: #{tpu_custom_call.1} parent=5 // pred_region
        %s902 = ssub.s32 %s20, 2
        // Predicated region
        $region65: #{tpu_custom_call.1} parent=63 // pred_check
          %p903 = pneg %p243
        $region66: #{tpu_custom_call.1} parent=63 // pred_check_branch
          %905 = sbr.rel (%p903) target = $region68
        $region67: #{tpu_custom_call.1} parent=63 // pred_region
          %s906 = sand.u32 %s228, 1
          %s907 = scalar_lea.sflag [#allocation4], %s906
          %s908 = sand.u32 %s228, 1
          %s909 = smul.addr %s908, 2
          %s910 = scalar_lea.vmem [#allocation3], %s909
          %911 = dma.done %s907, 32
        $region68: #{tpu_custom_call.1} parent=63 // pred_fallthru
          _
      $region64: #{tpu_custom_call.1} parent=5 // pred_fallthru
        _
    $region6: #{tpu_custom_call.1} parent=1 // loop_footer
      %s24 = sadd.s32 1, %s20
    $region7: #{tpu_custom_call.1} parent=1 // loop_footer_branch
      %19 = sbr.rel target = $region3
    $region8: #{tpu_custom_call.1} parent=1 // loop_exit
      _
    %912 = vsyncpa [#allocation4], 1
    %s913 = scalar_lea.sflag [#allocation4], 1
    %914 = vsyncpa %s913, 1

</llo_original>
